<compile_context>
chip_gen: v7x
topology: tpu7x:2x2x1
jax: 0.10.0
libtpu: 0.0.40
codegen_flags: <defaults>
</compile_context>

<pallas_src>
import functools

import jax
import jax.numpy as jnp
from jax.experimental import pallas as pl
from jax.experimental.pallas import tpu as pltpu

_EPS = 1e-8            # matches torch.nn.functional.cosine_similarity default
_EPS2 = _EPS * _EPS    # eps^2, used under the rsqrt (exact rewrite)

_DEFAULT_MAX_TILE_ROWS = 512
_VMEM_INPUT_BUDGET = 24 * 1024 * 1024   # bytes for the double-buffered inputs
_VMEM_LIMIT_BYTES = 48 * 1024 * 1024    # safe on v5e/v6e (128 MiB) and v7x (64 MiB)


def _round_up(n: int, m: int) -> int:
    return ((n + m - 1) // m) * m


def _gap_loss_kernel(img_ref, txt_ref, out_ref, *, batch: int):
    """One batch tile: writes sum over valid rows of (1 - cos(x_b, y_b))."""
    i = pl.program_id(0)

    x = img_ref[...].astype(jnp.float32)   # (TB, D)
    y = txt_ref[...].astype(jnp.float32)   # (TB, D)
    tb = x.shape[0]

    dot = jnp.sum(x * y, axis=-1, keepdims=True)   # (TB, 1)
    sx = jnp.sum(x * x, axis=-1, keepdims=True)    # (TB, 1)
    sy = jnp.sum(y * y, axis=-1, keepdims=True)    # (TB, 1)

    # cos = dot / (max(sqrt(sx), eps) * max(sqrt(sy), eps))
    #     = dot * rsqrt(max(sx, eps^2) * max(sy, eps^2))   (sqrt is monotone)
    denom_sq = jnp.maximum(sx, _EPS2) * jnp.maximum(sy, _EPS2)
    cos = dot * jax.lax.rsqrt(denom_sq)
    terms = 1.0 - cos                               # (TB, 1)

    # Mask rows beyond the true batch (ragged last tile / padded block).
    row_ids = jax.lax.broadcasted_iota(jnp.int32, (tb, 1), 0)
    valid = row_ids < (batch - i * tb)
    partial = jnp.sum(jnp.where(valid, terms, 0.0))

    # Lane-dense (1, 8, 128) output block; every element holds the partial sum.
    out_ref[...] = jnp.full(out_ref.shape, partial, dtype=jnp.float32)


def cross_modal_gap_loss(img_embs: jax.Array, text_embs: jax.Array,
                         *, max_tile_rows: int = _DEFAULT_MAX_TILE_ROWS) -> jax.Array:
    """Returns scalar mean(1 - cosine_similarity(img_embs, text_embs))."""
    assert img_embs.shape == text_embs.shape and img_embs.ndim == 2
    B, D = img_embs.shape

    # Size the batch tile to the VMEM budget (2 inputs x 2 pipeline buffers).
    bytes_per_row = 2 * D * (jnp.dtype(img_embs.dtype).itemsize
                             + jnp.dtype(text_embs.dtype).itemsize)
    tb_cap = max(8, (_VMEM_INPUT_BUDGET // max(bytes_per_row, 1)) // 8 * 8)
    tb = max(8, min(max_tile_rows, tb_cap, _round_up(B, 8)))
    num_tiles = pl.cdiv(B, tb)

    kernel = functools.partial(_gap_loss_kernel, batch=B)

    partials = pl.pallas_call(
        kernel,
        out_shape=jax.ShapeDtypeStruct((num_tiles, 8, 128), jnp.float32),
        grid=(num_tiles,),
        in_specs=[
            pl.BlockSpec((tb, D), lambda i: (i, 0)),
            pl.BlockSpec((tb, D), lambda i: (i, 0)),
        ],
        out_specs=pl.BlockSpec((1, 8, 128), lambda i: (i, 0, 0)),
        compiler_params=pltpu.CompilerParams(
            dimension_semantics=("parallel",),
            vmem_limit_bytes=_VMEM_LIMIT_BYTES,
        ),
    )(img_embs, text_embs)

    # Tiny final reduction in JAX: sum of per-tile partials / true batch size.
    return jnp.sum(partials[:, 0, 0]) / B


def _reference(img_embs, text_embs):
    x = img_embs.astype(jnp.float32)
    y = text_embs.astype(jnp.float32)
    dot = jnp.sum(x * y, axis=-1)
    nx = jnp.sqrt(jnp.sum(x * x, axis=-1))
    ny = jnp.sqrt(jnp.sum(y * y, axis=-1))
    cos = dot / (jnp.maximum(nx, _EPS) * jnp.maximum(ny, _EPS))
    return jnp.mean(1.0 - cos)


if __name__ == "__main__":
    key = jax.random.PRNGKey(0)
    k1, k2, k3, k4 = jax.random.split(key, 4)

    # Demo shape consistent with the module: batch of 8 embedding pairs, D=32.
    B, D = 8, 32
    img_embs = jax.random.normal(k1, (B, D), dtype=jnp.float32)
    text_embs = jax.random.normal(k2, (B, D), dtype=jnp.float32)

    loss = cross_modal_gap_loss(img_embs, text_embs)
    jax.block_until_ready(loss)
    ref = _reference(img_embs, text_embs)
    assert jnp.allclose(loss, ref, atol=1e-5, rtol=1e-5), (loss, ref)

    # Second small check: ragged multi-tile path (3 tiles of 8 rows, last tile
    # has only 4 valid rows) to exercise tiling + masking + parallel axis.
    B2, D2 = 20, 32
    img2 = jax.random.normal(k3, (B2, D2), dtype=jnp.float32)
    txt2 = jax.random.normal(k4, (B2, D2), dtype=jnp.float32)
    loss2 = cross_modal_gap_loss(img2, txt2, max_tile_rows=8)
    jax.block_until_ready(loss2)
    ref2 = _reference(img2, txt2)
    assert jnp.allclose(loss2, ref2, atol=1e-5, rtol=1e-5), (loss2, ref2)

    print("KERNEL_OK")
</pallas_src>

<mosaic_0001>
module attributes {stable_mosaic.version = 11 : i64} {
  func.func @_gap_loss_kernel(%arg0: i32, %arg1: memref<8x32xf32, #tpu.memory_space<vmem>>, %arg2: memref<8x32xf32, #tpu.memory_space<vmem>>, %arg3: memref<1x8x128xf32, #tpu.memory_space<vmem>>) attributes {dimension_semantics = [#tpu.dimension_semantics<parallel>], iteration_bounds = array<i64: 1>, scalar_prefetch = 0 : i64, scratch_operands = 0 : i64, tpu.core_type = #tpu.core_type<tc>, window_params = [{transform_indices = @transform_0, window_bounds = array<i64: 8, 32>}, {transform_indices = @transform_1, window_bounds = array<i64: 8, 32>}, {transform_indices = @transform_2, window_bounds = array<i64: 1, 8, 128>}]} {
    %c0 = arith.constant 0 : index
    %c0_0 = arith.constant 0 : index
    %0 = vector.load %arg1[%c0, %c0_0] : memref<8x32xf32, #tpu.memory_space<vmem>>, vector<8x32xf32>
    %c0_1 = arith.constant 0 : index
    %c0_2 = arith.constant 0 : index
    %1 = vector.load %arg2[%c0_1, %c0_2] : memref<8x32xf32, #tpu.memory_space<vmem>>, vector<8x32xf32>
    %2 = arith.mulf %0, %1 : vector<8x32xf32>
    %cst = arith.constant dense<0.000000e+00> : vector<8xf32>
    %3 = vector.multi_reduction <add>, %2, %cst [1] : vector<8x32xf32> to vector<8xf32>
    %4 = vector.shape_cast %3 : vector<8xf32> to vector<8x1xf32>
    %5 = arith.mulf %0, %0 : vector<8x32xf32>
    %cst_3 = arith.constant dense<0.000000e+00> : vector<8xf32>
    %6 = vector.multi_reduction <add>, %5, %cst_3 [1] : vector<8x32xf32> to vector<8xf32>
    %7 = vector.shape_cast %6 : vector<8xf32> to vector<8x1xf32>
    %8 = arith.mulf %1, %1 : vector<8x32xf32>
    %cst_4 = arith.constant dense<0.000000e+00> : vector<8xf32>
    %9 = vector.multi_reduction <add>, %8, %cst_4 [1] : vector<8x32xf32> to vector<8xf32>
    %10 = vector.shape_cast %9 : vector<8xf32> to vector<8x1xf32>
    %cst_5 = arith.constant 1.000000e-16 : f32
    %11 = vector.broadcast %cst_5 : f32 to vector<8x1xf32>
    %12 = arith.maximumf %7, %11 : vector<8x1xf32>
    %cst_6 = arith.constant 1.000000e-16 : f32
    %13 = vector.broadcast %cst_6 : f32 to vector<8x1xf32>
    %14 = arith.maximumf %10, %13 : vector<8x1xf32>
    %15 = arith.mulf %12, %14 : vector<8x1xf32>
    %16 = math.rsqrt %15 : vector<8x1xf32>
    %17 = arith.mulf %4, %16 : vector<8x1xf32>
    %cst_7 = arith.constant 1.000000e+00 : f32
    %18 = vector.broadcast %cst_7 : f32 to vector<8x1xf32>
    %19 = arith.subf %18, %17 : vector<8x1xf32>
    %20 = tpu.iota {dimensions = array<i32: 0>} : vector<8x1xi32>
    %c8_i32 = arith.constant 8 : i32
    %21 = arith.muli %arg0, %c8_i32 : i32
    %c8_i32_8 = arith.constant 8 : i32
    %22 = arith.subi %c8_i32_8, %21 : i32
    %23 = vector.broadcast %22 : i32 to vector<8x1xi32>
    %24 = arith.cmpi slt, %20, %23 : vector<8x1xi32>
    %cst_9 = arith.constant 0.000000e+00 : f32
    %25 = vector.broadcast %cst_9 : f32 to vector<8x1xf32>
    %26 = arith.select %24, %19, %25 : vector<8x1xi1>, vector<8x1xf32>
    %27 = vector.shape_cast %26 : vector<8x1xf32> to vector<1x8x1xf32>
    %cst_10 = arith.constant dense<0.000000e+00> : vector<1xf32>
    %28 = vector.multi_reduction <add>, %27, %cst_10 [1, 2] : vector<1x8x1xf32> to vector<1xf32>
    %29 = vector.shape_cast %28 : vector<1xf32> to vector<1x1x1xf32>
    %30 = vector.extract %29[0, 0, 0] : f32 from vector<1x1x1xf32>
    %31 = vector.broadcast %30 : f32 to vector<1x8x128xf32>
    %c0_11 = arith.constant 0 : index
    %c0_12 = arith.constant 0 : index
    %c0_13 = arith.constant 0 : index
    %32 = vector.load %arg3[%c0_11, %c0_12, %c0_13] : memref<1x8x128xf32, #tpu.memory_space<vmem>>, vector<1x8x128xf32>
    tpu.vector_store %arg3[%c0_11, %c0_12, %c0_13], %31 {strides = array<i32>} : memref<1x8x128xf32, #tpu.memory_space<vmem>>, vector<1x8x128xf32>,
    return
  }
  func.func @transform_0(%arg0: i32) -> (i32, i32) {
    %c0_i32 = arith.constant 0 : i32
    %c0_i32_0 = arith.constant 0 : i32
    return %arg0, %c0_i32 : i32, i32
  }
  func.func @transform_1(%arg0: i32) -> (i32, i32) {
    %c0_i32 = arith.constant 0 : i32
    %c0_i32_0 = arith.constant 0 : i32
    return %arg0, %c0_i32 : i32, i32
  }
  func.func @transform_2(%arg0: i32) -> (i32, i32, i32) {
    %c0_i32 = arith.constant 0 : i32
    %c0_i32_0 = arith.constant 0 : i32
    %c0_i32_1 = arith.constant 0 : i32
    return %arg0, %c0_i32, %c0_i32_0 : i32, i32, i32
  }
}

</mosaic_0001>

<llo_original>
// kernel: tpu_custom_call.1
$region0: #{tpu_custom_call.1}
  #allocation0 [shape = 'u32[]', space=smem, size = 0x4, offset = 0x4, fixed_abs, tag = 'smem constant byte address 0x4 - core index']
  #allocation1 [shape = 'u32[144,128]{1,0:T(1,128)}', space=vmem, size = 0x12000, scoped, tag = 'internal scratch']
  %s0 = inlined_call_operand.hbm [shape: f32[8,32], index: 0, kind: input, shape index: {}]
  %s1 = inlined_call_operand.hbm [shape: f32[8,32], index: 1, kind: input, shape index: {}]
  %s2 = inlined_call_operand.hbm [shape: f32[1,8,128], index: 2, kind: output, shape index: {}]
  %s3 = sld [smem:[#allocation0]]
  $region26: #{tpu_custom_call.1} parent=0
    _
  %s5 = ssub.s32 1, %s3
  %s6 = scalar_select 0, %s5, %s3
  $region1: #{tpu_custom_call.1} parent=0
    #allocation2 [shape = 'u8[4096]{0}', space=vmem, size = 0x1000, scoped, tag = 'input window, operand 0, single buffered']
    #allocation3 [shape = 's32[1]{0}', space=sflag, size = 0x4, scoped, tag = 'scoped memory for tpu_custom_call.1']
    #allocation4 [shape = 's32[1]{0}', space=sflag, size = 0x4, scoped, tag = 'scoped memory for tpu_custom_call.1']
    #allocation5 [shape = 'u8[4096]{0}', space=vmem, size = 0x1000, scoped, tag = 'input window, operand 1, single buffered']
    #allocation6 [shape = 's32[1]{0}', space=sflag, size = 0x4, scoped, tag = 'scoped memory for tpu_custom_call.1']
    #allocation7 [shape = 'u8[4096]{0}', space=vmem, size = 0x1000, scoped, tag = 'output window, operand 0, single buffered']
    %7 = vsyncpa [#allocation3], 0
    %8 = vsyncpa [#allocation6], 0
    %9 = vsyncpa [#allocation4], 0
    // Predicated region
    $region2: #{tpu_custom_call.1} parent=1 // pred_check
      _
    $region3: #{tpu_custom_call.1} parent=1 // pred_check_branch
      %11 = sbr.rel (0) target = $region5
    $region4: #{tpu_custom_call.1} parent=1 // pred_region
      %s13 = ssub.s32 128, 128
      %14 = vsyncadd [#allocation3], %s13
      %s16 = sshll.u32 [#allocation2], 4
      %s17 = int_to_ptr.vmem [resolvable:$true] %s16
      %19 = dma.hbm_to_vmem [thread:$0]  %s0, 128, %s17, [#allocation3]
    $region5: #{tpu_custom_call.1} parent=1 // pred_fallthru
      _
    // Predicated region
    $region6: #{tpu_custom_call.1} parent=1 // pred_check
      _
    $region7: #{tpu_custom_call.1} parent=1 // pred_check_branch
      %21 = sbr.rel (0) target = $region9
    $region8: #{tpu_custom_call.1} parent=1 // pred_region
      %s23 = ssub.s32 128, 128
      %24 = vsyncadd [#allocation6], %s23
      %s26 = sshll.u32 [#allocation5], 4
      %s27 = int_to_ptr.vmem [resolvable:$true] %s26
      %29 = dma.hbm_to_vmem [thread:$0]  %s1, 128, %s27, [#allocation6]
    $region9: #{tpu_custom_call.1} parent=1 // pred_fallthru
      _
    // Predicated region
    $region10: #{tpu_custom_call.1} parent=1 // pred_check
      _
    $region11: #{tpu_custom_call.1} parent=1 // pred_check_branch
      %31 = sbr.rel (0) target = $region13
    $region12: #{tpu_custom_call.1} parent=1 // pred_region
      %32 = dma.done [#allocation3], 128
    $region13: #{tpu_custom_call.1} parent=1 // pred_fallthru
      _
    // Predicated region
    $region14: #{tpu_custom_call.1} parent=1 // pred_check
      _
    $region15: #{tpu_custom_call.1} parent=1 // pred_check_branch
      %34 = sbr.rel (0) target = $region17
    $region16: #{tpu_custom_call.1} parent=1 // pred_region
      %35 = dma.done [#allocation6], 128
    $region17: #{tpu_custom_call.1} parent=1 // pred_fallthru
      _
    %v36 = vld [vmem:[#allocation2] sm:$0xff]
    %v37 = vld [vmem:[#allocation5] sm:$0xff]
    %v38 = vmul.f32 %v36, %v37
    %vm39 = vcmask 261120
    %v40 = vsel %vm39, %v38, 0.0
    %41 = vadd.xlane.f32.xlu0 %v40
    %v42 = vpop.xlane.xlu0 %41
    %v43 = vmul.f32 %v36, %v36
    %v44 = vsel %vm39, %v43, 0.0
    %45 = vadd.xlane.f32.xlu0 %v44
    %v46 = vpop.xlane.xlu0 %45
    %v47 = vmul.f32 %v37, %v37
    %v48 = vsel %vm39, %v47, 0.0
    %49 = vadd.xlane.f32.xlu0 %v48
    %v50 = vpop.xlane.xlu0 %49
    %v51 = vmax.f32 %v46, 1e-16
    %v52 = vmax.f32 %v50, 1e-16
    %v53 = vmul.f32 %v51, %v52
    %v54 = vrsqrt.pop %v53
    %v55 = vmul.f32 %v42, %v54
    %v56 = vsub.f32 1.0, %v55
    %v57 = vlaneseq
    %v58 = vshrl.u32 %v57, 7
    %s59 = smul.u32 0, 8
    %s60 = ssub.s32 8, %s59
    %v61 = vstv %s60
    %vm62 = vcmp.lt.s32.totalorder %v58, %v61
    %v63 = vsel %vm62, %v56, 0.0
    %vm64 = vcmask 7168
    %v65 = vsel %vm64, %v63, 0.0
    %66 = vadd.xlane.f32.xlu0 %v65
    %v67 = vpop.xlane.xlu0 %66
    %v68 = vrot.slane %v67, 4
    %v69 = vadd.f32 %v67, %v68
    %v70 = vrot.slane %v69, 2
    %v71 = vadd.f32 %v69, %v70
    %v72 = vrot.slane %v71, 1
    %v73 = vadd.f32 %v71, %v72
    %s74 = vtos %v73
    %v75 = vstv %s74
    %76 = vst [vmem:[#allocation7] sm:$0xff] %v75
    // Predicated region
    $region18: #{tpu_custom_call.1} parent=1 // pred_check
      _
    $region19: #{tpu_custom_call.1} parent=1 // pred_check_branch
      %78 = sbr.rel (0) target = $region21
    $region20: #{tpu_custom_call.1} parent=1 // pred_region
      %s80 = ssub.s32 128, 128
      %81 = vsyncadd [#allocation4], %s80
      %s83 = sshll.u32 [#allocation7], 4
      %s84 = int_to_ptr.vmem [resolvable:$true] %s83
      %86 = dma.vmem_to_hbm [thread:$0]  %s84, 128, %s2, [#allocation4]
    $region21: #{tpu_custom_call.1} parent=1 // pred_fallthru
      _
    // Predicated region
    $region22: #{tpu_custom_call.1} parent=1 // pred_check
      _
    $region23: #{tpu_custom_call.1} parent=1 // pred_check_branch
      %88 = sbr.rel (0) target = $region25
    $region24: #{tpu_custom_call.1} parent=1 // pred_region
      %89 = dma.done [#allocation4], 128
    $region25: #{tpu_custom_call.1} parent=1 // pred_fallthru
      _
    %90 = vsyncpa [#allocation3], 1
    %91 = vsyncpa [#allocation6], 1
    %92 = vsyncpa [#allocation4], 1

</llo_original>
